<compile_context>
chip_gen: v7x
topology: tpu7x:2x2x1
jax: 0.10.0
libtpu: 0.0.40
codegen_flags: <defaults>
</compile_context>

<pallas_src>
import functools

import jax
import jax.numpy as jnp
from jax.experimental import pallas as pl
from jax.experimental.pallas import tpu as pltpu


# --------------------------------------------------------------------------- kernel


def _ffn_kernel(x_ref, w1_ref, b1_ref, w2_ref, b2_ref, o_ref, acc_ref):
    # x_ref:  (TM, D)   row tile of tokens (compute dtype, e.g. bf16)
    # w1_ref: (D, TH)   first linear weight chunk ([in, out] layout)
    # b1_ref: (1, TH)   f32
    # w2_ref: (TH, D)   second linear weight chunk
    # b2_ref: (1, D)    f32
    # acc_ref:(TM, D)   f32 accumulator (persists across the hidden-dim grid axis)
    k = pl.program_id(1)

    @pl.when(k == 0)
    def _init():
        # Fold the second bias into the accumulator init (removes a (TM, D) add later).
        acc_ref[...] = jnp.broadcast_to(
            b2_ref[...].astype(jnp.float32), acc_ref.shape)

    # Linear 1 chunk: native-dtype MXU matmul, f32 accumulation.
    h = jnp.dot(x_ref[...], w1_ref[...], preferred_element_type=jnp.float32)
    h = h + b1_ref[...].astype(jnp.float32)

    # Exact (erf-based) GELU in f32, matching torch.nn.GELU() default.
    h = 0.5 * h * (1.0 + jax.lax.erf(h * 0.7071067811865476))

    # TODO(synk): nn.Dropout(p=0.1) is identity at inference; training-mode masking with
    # pltpu.prng_random_bits (+ 1/(1-p) scaling) is omitted here.

    # Linear 2 chunk, accumulated into the f32 scratch (native-dtype operands on the MXU).
    acc_ref[...] += jnp.dot(h.astype(w2_ref.dtype), w2_ref[...],
                            preferred_element_type=jnp.float32)

    @pl.when(k == pl.num_programs(1) - 1)
    def _finalize():
        o_ref[...] = acc_ref[...].astype(o_ref.dtype)


# --------------------------------------------------------------------------- helpers


def _round_up(n, m):
    return ((n + m - 1) // m) * m


def _sublane_multiple(dtype):
    return {1: 32, 2: 16, 4: 8}.get(jnp.dtype(dtype).itemsize, 8)


def _tpu_defaults():
    """Generation-aware (tm, th, vmem_capacity_bytes)."""
    vmem_cap = None
    kind = ""
    try:
        vmem_cap = int(pltpu.get_tpu_info().vmem_capacity_bytes)
    except Exception:
        vmem_cap = None
    try:
        kind = jax.devices()[0].device_kind.lower()
    except Exception:
        kind = ""
    if vmem_cap is None:
        # Conservative fallback: v5/v6 have 128 MiB, anything unknown assume 64 MiB (v7x/TC).
        vmem_cap = (128 if ("v5" in kind or "v6" in kind) else 64) * 1024 * 1024
    if "v5" in kind:
        tm, th = 512, 512          # v5e: HBM break-even ~240 FLOPs/byte
    elif vmem_cap <= 80 * 1024 * 1024:
        tm, th = 768, 256          # v7x-like: 64 MiB/TC -> small th, spend VMEM on tm
    else:
        tm, th = 1024, 1024        # v6e-like: 128 MiB -> big tiles, fewer k steps
    return tm, th, vmem_cap


def _vmem_estimate(tm_e, th_e, D, compute_dtype, out_dtype):
    c = jnp.dtype(compute_dtype).itemsize
    o = jnp.dtype(out_dtype).itemsize
    return (2 * tm_e * D * c          # x tile (double-buffered)
            + 2 * D * th_e * c        # w1 chunk
            + 2 * th_e * 4            # b1 chunk (f32)
            + 2 * th_e * D * c        # w2 chunk
            + 2 * D * 4               # b2 (f32)
            + 2 * tm_e * D * o        # output tile
            + tm_e * D * 4            # f32 accumulator scratch
            + 2 * 1024 * 1024)        # compiler-internal scratch allowance


# --------------------------------------------------------------------------- wrapper


def prepare_ffn(w1, b1, w2, b2, *, tm=None, th=None, compute_dtype=jnp.bfloat16):
    """One-time setup (keep OUT of the per-call path): pick generation-aware tiles,
    cast weights to the MXU compute dtype and pad the hidden dim once."""
    D, H = w1.shape
    tm_d, th_d, vmem_cap = _tpu_defaults()
    tm = tm or tm_d
    th = th or th_d

    if H <= th:
        th_eff, H_pad = H, H
    else:
        th_eff = _round_up(th, 128)
        H_pad = _round_up(H, th_eff)

    w1p = w1.astype(compute_dtype)
    w2p = w2.astype(compute_dtype)
    b1p = b1.astype(jnp.float32)
    b2p = b2.astype(jnp.float32)
    if H_pad != H:
        # Zero padding of the hidden dim is exact: GELU(0)=0 and padded w2 rows are zero.
        w1p = jnp.pad(w1p, ((0, 0), (0, H_pad - H)))
        b1p = jnp.pad(b1p, ((0, 0), (0, H_pad - H)))
        w2p = jnp.pad(w2p, ((0, H_pad - H), (0, 0)))

    params = (w1p, b1p, w2p, b2p)
    cfg = dict(tm=int(tm), th_eff=int(th_eff), vmem_cap=int(vmem_cap),
               compute_dtype=compute_dtype)
    return params, cfg


@functools.partial(jax.jit,
                   static_argnames=("tm", "th_eff", "vmem_cap", "compute_dtype"))
def ffn_forward(x, w1p, b1p, w2p, b2p, *, tm, th_eff, vmem_cap, compute_dtype):
    """x: [B, S, dim]. Weights already prepared by prepare_ffn. Returns [B, S, dim]."""
    B, S, D = x.shape
    H_pad = w1p.shape[1]
    M = B * S
    out_dtype = x.dtype
    sub = _sublane_multiple(compute_dtype)

    # Row tile: large by default, clamped for small inputs, multiple of the sublane width.
    tm_eff = _round_up(min(tm, _round_up(M, sub)), sub)
    # Keep >= 2 row-tile iterations when rows allow it, so the "parallel" axis can be
    # sharded across both TensorCores on v7x.
    if tm_eff >= _round_up(M, sub) and M > 2 * sub:
        tm_eff = _round_up((M + 1) // 2, sub)

    # Shrink tiles until the double-buffered working set fits the per-generation budget.
    budget = int(vmem_cap * 0.85)
    th_e = th_eff
    while (_vmem_estimate(tm_eff, th_e, D, compute_dtype, out_dtype) > budget
           and th_e >= 256 and (th_e // 2) % 128 == 0 and H_pad % (th_e // 2) == 0):
        th_e //= 2
    while (_vmem_estimate(tm_eff, th_e, D, compute_dtype, out_dtype) > budget
           and tm_eff > 2 * sub):
        tm_eff = max(_round_up(tm_eff // 2, sub), sub)

    M_pad = _round_up(M, tm_eff)
    grid = (M_pad // tm_eff, H_pad // th_e)

    est = _vmem_estimate(tm_eff, th_e, D, compute_dtype, out_dtype)
    vmem_limit = int(max(min(int(est * 1.3), budget), 16 * 1024 * 1024))
    vmem_limit = min(vmem_limit, budget)

    # Cast activations to the MXU compute dtype (weights already cast in prepare_ffn).
    x2 = x.reshape(M, D).astype(compute_dtype)
    if M_pad != M:
        # TODO(synk): ragged last row tile could be handled in-kernel (masked store) to
        # save this extra activation pass for latency-critical decode shapes.
        x2 = jnp.pad(x2, ((0, M_pad - M), (0, 0)))

    out = pl.pallas_call(
        _ffn_kernel,
        out_shape=jax.ShapeDtypeStruct((M_pad, D), out_dtype),
        grid_spec=pltpu.PrefetchScalarGridSpec(
            num_scalar_prefetch=0,
            grid=grid,
            in_specs=[
                pl.BlockSpec((tm_eff, D), lambda i, k: (i, 0)),   # x row tile
                pl.BlockSpec((D, th_e), lambda i, k: (0, k)),     # w1 hidden chunk
                pl.BlockSpec((1, th_e), lambda i, k: (0, k)),     # b1 hidden chunk
                pl.BlockSpec((th_e, D), lambda i, k: (k, 0)),     # w2 hidden chunk
                pl.BlockSpec((1, D), lambda i, k: (0, 0)),        # b2
            ],
            out_specs=pl.BlockSpec((tm_eff, D), lambda i, k: (i, 0)),
            scratch_shapes=[pltpu.VMEM((tm_eff, D), jnp.float32)],
        ),
        compiler_params=pltpu.CompilerParams(
            dimension_semantics=("parallel", "arbitrary"),
            vmem_limit_bytes=vmem_limit,
        ),
    )(x2, w1p, b1p, w2p, b2p)

    if M_pad != M:
        out = out[:M]
    return out.reshape(B, S, D)


# --------------------------------------------------------------------------- init / demo


def init_params(key, dim, hidden_dim, dtype=jnp.float32):
    """Deterministic init mirroring torch.nn.Linear (uniform(-1/sqrt(fan_in), +1/sqrt(fan_in)))."""
    k1, k2, k3, k4 = jax.random.split(key, 4)
    bound1 = 1.0 / (dim ** 0.5)
    bound2 = 1.0 / (hidden_dim ** 0.5)
    # Stored as [in, out] so the kernel does x @ W directly.
    w1 = jax.random.uniform(k1, (dim, hidden_dim), dtype, -bound1, bound1)
    b1 = jax.random.uniform(k2, (1, hidden_dim), dtype, -bound1, bound1)
    w2 = jax.random.uniform(k3, (hidden_dim, dim), dtype, -bound2, bound2)
    b2 = jax.random.uniform(k4, (1, dim), dtype, -bound2, bound2)
    return w1, b1, w2, b2


if __name__ == "__main__":
    key = jax.random.PRNGKey(0)
    kx, kp = jax.random.split(key)

    B, S, dim, hidden_dim = 2, 8, 32, 64
    x = jax.random.normal(kx, (B, S, dim), jnp.float32)
    w1, b1, w2, b2 = init_params(kp, dim, hidden_dim)

    # One-time prep (weight cast + hidden-dim padding + generation-aware tiles).
    params, cfg = prepare_ffn(w1, b1, w2, b2)

    out = ffn_forward(x, *params, **cfg)
    out = jax.block_until_ready(out)
    assert out.shape == (B, S, dim)

    # Reference 1: same precision recipe as the kernel (bf16 MXU operands, f32 accum).
    x2 = x.reshape(-1, dim)
    xb = x2.astype(jnp.bfloat16)
    w1b = w1.astype(jnp.bfloat16)
    w2b = w2.astype(jnp.bfloat16)
    h = jnp.dot(xb, w1b, preferred_element_type=jnp.float32) + b1
    h = 0.5 * h * (1.0 + jax.lax.erf(h * 0.7071067811865476))
    ref_bf16 = (jnp.dot(h.astype(jnp.bfloat16), w2b,
                        preferred_element_type=jnp.float32) + b2).reshape(B, S, dim)
    err_bf16 = float(jnp.max(jnp.abs(out - ref_bf16)))
    assert jnp.allclose(out, ref_bf16, atol=3e-3, rtol=3e-3), err_bf16

    # Reference 2: pure-f32 eval-mode FFN (the torch semantics), looser tolerance
    # accounting for the deliberate bf16 MXU cast.
    h32 = jax.nn.gelu(x2 @ w1 + b1, approximate=False)
    ref_f32 = (h32 @ w2 + b2).reshape(B, S, dim)
    err_f32 = float(jnp.max(jnp.abs(out - ref_f32)))
    assert jnp.allclose(out, ref_f32, atol=5e-2, rtol=5e-2), err_f32

    print("KERNEL_OK")
</pallas_src>

<mosaic_0001>
module attributes {stable_mosaic.version = 11 : i64} {
  func.func @_ffn_kernel(%arg0: i32, %arg1: i32, %arg2: memref<16x32xbf16, #tpu.memory_space<vmem>>, %arg3: memref<32x64xbf16, #tpu.memory_space<vmem>>, %arg4: memref<1x64xf32, #tpu.memory_space<vmem>>, %arg5: memref<64x32xbf16, #tpu.memory_space<vmem>>, %arg6: memref<1x32xf32, #tpu.memory_space<vmem>>, %arg7: memref<16x32xf32, #tpu.memory_space<vmem>>, %arg8: memref<16x32xf32, #tpu.memory_space<vmem>>) attributes {dimension_semantics = [#tpu.dimension_semantics<parallel>, #tpu.dimension_semantics<arbitrary>], iteration_bounds = array<i64: 1, 1>, scalar_prefetch = 0 : i64, scratch_operands = 1 : i64, tpu.core_type = #tpu.core_type<tc>, window_params = [{transform_indices = @transform_0, window_bounds = array<i64: 16, 32>}, {transform_indices = @transform_1, window_bounds = array<i64: 32, 64>}, {transform_indices = @transform_2, window_bounds = array<i64: 1, 64>}, {transform_indices = @transform_3, window_bounds = array<i64: 64, 32>}, {pipeline_mode = #tpu.pipeline_mode<synchronous>, transform_indices = @transform_4, window_bounds = array<i64: 1, 32>}, {transform_indices = @transform_5, window_bounds = array<i64: 16, 32>}]} {
    %c0_i32 = arith.constant 0 : i32
    %0 = arith.cmpi eq, %arg1, %c0_i32 : i32
    %1 = arith.extui %0 : i1 to i32
    %c0_i32_0 = arith.constant 0 : i32
    %2 = arith.cmpi ne, %1, %c0_i32_0 : i32
    scf.if %2 {
      %c0_18 = arith.constant 0 : index
      %c0_19 = arith.constant 0 : index
      %26 = vector.load %arg6[%c0_18, %c0_19] : memref<1x32xf32, #tpu.memory_space<vmem>>, vector<1x32xf32>
      %27 = vector.shape_cast %26 : vector<1x32xf32> to vector<1x32xf32>
      %28 = vector.broadcast %27 : vector<1x32xf32> to vector<16x32xf32>
      %c0_20 = arith.constant 0 : index
      %c0_21 = arith.constant 0 : index
      %29 = vector.load %arg8[%c0_20, %c0_21] : memref<16x32xf32, #tpu.memory_space<vmem>>, vector<16x32xf32>
      tpu.vector_store %arg8[%c0_20, %c0_21], %28 {strides = array<i32>} : memref<16x32xf32, #tpu.memory_space<vmem>>, vector<16x32xf32>,
    } else {
    }
    %c0 = arith.constant 0 : index
    %c0_1 = arith.constant 0 : index
    %3 = vector.load %arg2[%c0, %c0_1] : memref<16x32xbf16, #tpu.memory_space<vmem>>, vector<16x32xbf16>
    %c0_2 = arith.constant 0 : index
    %c0_3 = arith.constant 0 : index
    %4 = vector.load %arg3[%c0_2, %c0_3] : memref<32x64xbf16, #tpu.memory_space<vmem>>, vector<32x64xbf16>
    %cst = arith.constant dense<0.000000e+00> : vector<16x64xf32>
    %5 = tpu.matmul %3, %4, %cst {dimension_numbers = #tpu.dot_dimension_numbers<[1], [0], [0], [1], [0, 0, 1, 1], [], []>} : vector<16x32xbf16>, vector<32x64xbf16>, vector<16x64xf32> -> vector<16x64xf32>
    %c0_4 = arith.constant 0 : index
    %c0_5 = arith.constant 0 : index
    %6 = vector.load %arg4[%c0_4, %c0_5] : memref<1x64xf32, #tpu.memory_space<vmem>>, vector<1x64xf32>
    %7 = vector.broadcast %6 : vector<1x64xf32> to vector<16x64xf32>
    %8 = arith.addf %5, %7 : vector<16x64xf32>
    %cst_6 = arith.constant 5.000000e-01 : f32
    %9 = vector.broadcast %cst_6 : f32 to vector<16x64xf32>
    %10 = arith.mulf %9, %8 : vector<16x64xf32>
    %cst_7 = arith.constant 0.707106769 : f32
    %11 = vector.broadcast %cst_7 : f32 to vector<16x64xf32>
    %12 = arith.mulf %8, %11 : vector<16x64xf32>
    %13 = math.erf %12 : vector<16x64xf32>
    %cst_8 = arith.constant 1.000000e+00 : f32
    %14 = vector.broadcast %cst_8 : f32 to vector<16x64xf32>
    %15 = arith.addf %14, %13 : vector<16x64xf32>
    %16 = arith.mulf %10, %15 : vector<16x64xf32>
    %c0_9 = arith.constant 0 : index
    %c0_10 = arith.constant 0 : index
    %17 = vector.load %arg8[%c0_9, %c0_10] : memref<16x32xf32, #tpu.memory_space<vmem>>, vector<16x32xf32>
    %18 = arith.truncf %16 : vector<16x64xf32> to vector<16x64xbf16>
    %c0_11 = arith.constant 0 : index
    %c0_12 = arith.constant 0 : index
    %19 = vector.load %arg5[%c0_11, %c0_12] : memref<64x32xbf16, #tpu.memory_space<vmem>>, vector<64x32xbf16>
    %cst_13 = arith.constant dense<0.000000e+00> : vector<16x32xf32>
    %20 = tpu.matmul %18, %19, %cst_13 {dimension_numbers = #tpu.dot_dimension_numbers<[1], [0], [0], [1], [0, 0, 1, 1], [], []>} : vector<16x64xbf16>, vector<64x32xbf16>, vector<16x32xf32> -> vector<16x32xf32>
    %21 = arith.addf %17, %20 : vector<16x32xf32>
    %c0_14 = arith.constant 0 : index
    %c0_15 = arith.constant 0 : index
    %22 = vector.load %arg8[%c0_14, %c0_15] : memref<16x32xf32, #tpu.memory_space<vmem>>, vector<16x32xf32>
    tpu.vector_store %arg8[%c0_14, %c0_15], %21 {strides = array<i32>} : memref<16x32xf32, #tpu.memory_space<vmem>>, vector<16x32xf32>,
    %c0_i32_16 = arith.constant 0 : i32
    %23 = arith.cmpi eq, %arg1, %c0_i32_16 : i32
    %24 = arith.extui %23 : i1 to i32
    %c0_i32_17 = arith.constant 0 : i32
    %25 = arith.cmpi ne, %24, %c0_i32_17 : i32
    scf.if %25 {
      %c0_18 = arith.constant 0 : index
      %c0_19 = arith.constant 0 : index
      %26 = vector.load %arg8[%c0_18, %c0_19] : memref<16x32xf32, #tpu.memory_space<vmem>>, vector<16x32xf32>
      %c0_20 = arith.constant 0 : index
      %c0_21 = arith.constant 0 : index
      %27 = vector.load %arg7[%c0_20, %c0_21] : memref<16x32xf32, #tpu.memory_space<vmem>>, vector<16x32xf32>
      tpu.vector_store %arg7[%c0_20, %c0_21], %26 {strides = array<i32>} : memref<16x32xf32, #tpu.memory_space<vmem>>, vector<16x32xf32>,
    } else {
    }
    return
  }
  func.func @transform_0(%arg0: i32, %arg1: i32) -> (i32, i32) {
    %c0_i32 = arith.constant 0 : i32
    %c0_i32_0 = arith.constant 0 : i32
    return %arg0, %c0_i32 : i32, i32
  }
  func.func @transform_1(%arg0: i32, %arg1: i32) -> (i32, i32) {
    %c0_i32 = arith.constant 0 : i32
    %c0_i32_0 = arith.constant 0 : i32
    return %c0_i32, %arg1 : i32, i32
  }
  func.func @transform_2(%arg0: i32, %arg1: i32) -> (i32, i32) {
    %c0_i32 = arith.constant 0 : i32
    %c0_i32_0 = arith.constant 0 : i32
    return %c0_i32, %arg1 : i32, i32
  }
  func.func @transform_3(%arg0: i32, %arg1: i32) -> (i32, i32) {
    %c0_i32 = arith.constant 0 : i32
    %c0_i32_0 = arith.constant 0 : i32
    return %arg1, %c0_i32 : i32, i32
  }
  func.func @transform_4(%arg0: i32, %arg1: i32) -> (i32, i32) {
    %c0_i32 = arith.constant 0 : i32
    %c0_i32_0 = arith.constant 0 : i32
    %c0_i32_1 = arith.constant 0 : i32
    return %c0_i32, %c0_i32_0 : i32, i32
  }
  func.func @transform_5(%arg0: i32, %arg1: i32) -> (i32, i32) {
    %c0_i32 = arith.constant 0 : i32
    %c0_i32_0 = arith.constant 0 : i32
    return %arg0, %c0_i32 : i32, i32
  }
}

</mosaic_0001>

<llo_original>
// kernel: ffn_forward.1
$region0: #{ffn_forward.1}
  #allocation0 [shape = 'u32[]', space=smem, size = 0x4, offset = 0x4, fixed_abs, tag = 'smem constant byte address 0x4 - core index']
  #allocation1 [shape = 'u32[144,128]{1,0:T(1,128)}', space=vmem, size = 0x12000, scoped, tag = 'internal scratch']
  #allocation2 [shape = 'f32[16,32]{1,0:T(8,128)}', space=vmem, size = 0x2000, scoped, tag = 'scratch operand']
  %s0 = inlined_call_operand.vmem [shape: bf16[16,32], index: 0, kind: input, shape index: {}]
  %s1 = inlined_call_operand.vmem [shape: bf16[32,64], index: 1, kind: input, shape index: {}]
  %s2 = inlined_call_operand.vmem [shape: f32[1,64], index: 2, kind: input, shape index: {}]
  %s3 = inlined_call_operand.vmem [shape: bf16[64,32], index: 3, kind: input, shape index: {}]
  %s4 = inlined_call_operand.vmem [shape: f32[1,32], index: 4, kind: input, shape index: {}]
  %s5 = inlined_call_operand.hbm [shape: f32[16,32], index: 5, kind: output, shape index: {}]
  %s6 = sld [smem:[#allocation0]]
  $region38: #{ffn_forward.1} parent=0
    _
  %s8 = ssub.s32 1, %s6
  %s9 = scalar_select 0, %s8, %s6
  $region1: #{ffn_forward.1} parent=0
    #allocation3 [shape = 'u8[8192]{0}', space=vmem, size = 0x2000, scoped, tag = 'output window, operand 0, single buffered']
    #allocation4 [shape = 's32[1]{0}', space=sflag, size = 0x4, scoped, tag = 'scoped memory for ffn_forward.1']
    %10 = vsyncpa [#allocation4], 0
    // Predicated region
    $region2: #{ffn_forward.1} parent=1 // pred_check
      _
    $region3: #{ffn_forward.1} parent=1 // pred_check_branch
      %12 = sbr.rel (0) target = $region5
    $region4: #{ffn_forward.1} parent=1 // pred_region
      _
    $region5: #{ffn_forward.1} parent=1 // pred_fallthru
      _
    // Predicated region
    $region6: #{ffn_forward.1} parent=1 // pred_check
      _
    $region7: #{ffn_forward.1} parent=1 // pred_check_branch
      %14 = sbr.rel (0) target = $region9
    $region8: #{ffn_forward.1} parent=1 // pred_region
      _
    $region9: #{ffn_forward.1} parent=1 // pred_fallthru
      _
    // Predicated region
    $region10: #{ffn_forward.1} parent=1 // pred_check
      _
    $region11: #{ffn_forward.1} parent=1 // pred_check_branch
      %16 = sbr.rel (0) target = $region13
    $region12: #{ffn_forward.1} parent=1 // pred_region
      _
    $region13: #{ffn_forward.1} parent=1 // pred_fallthru
      _
    // Predicated region
    $region14: #{ffn_forward.1} parent=1 // pred_check
      _
    $region15: #{ffn_forward.1} parent=1 // pred_check_branch
      %18 = sbr.rel (0) target = $region17
    $region16: #{ffn_forward.1} parent=1 // pred_region
      _
    $region17: #{ffn_forward.1} parent=1 // pred_fallthru
      _
    // Predicated region
    $region18: #{ffn_forward.1} parent=1 // pred_check
      _
    $region19: #{ffn_forward.1} parent=1 // pred_check_branch
      %20 = sbr.rel (0) target = $region21
    $region20: #{ffn_forward.1} parent=1 // pred_region
      _
    $region21: #{ffn_forward.1} parent=1 // pred_fallthru
      _
    %p22 = scmp.eq.s32.totalorder 0, 0
    // Predicated region
    $region22: #{ffn_forward.1} parent=1 // pred_check
      %p23 = pneg %p22
    $region23: #{ffn_forward.1} parent=1 // pred_check_branch
      %25 = sbr.rel (%p23) target = $region25
    $region24: #{ffn_forward.1} parent=1 // pred_region
      %v26 = vld [vmem:[%s4] sm:$0x1]
      %v28 = vlaneseq
      %v29 = vshrl.u32 %v28, 7
      %v30 = vsub.s32 0, %v29
      %v31 = vrot.slane %v26, %v30
      %vm33 = vcmask 261120
      %34 = vst.msk [vmem:[#allocation2] sm:$0xff] %vm33, %v31
      %35 = vst.msk [vmem:[#allocation2 + $0x8] sm:$0xff] %vm33, %v31
    $region25: #{ffn_forward.1} parent=1 // pred_fallthru
      _
    %v36 = vld [vmem:[%s0] sm:$0xf]
    %v37 = vld [vmem:[%s0 + $0x4] sm:$0xf]
    %v38 = vld [vmem:[%s1] sm:$0xf]
    %v39 = vld [vmem:[%s1 + $0x4] sm:$0xf]
    %v40 = vld [vmem:[%s1 + $0x8] sm:$0xf]
    %v41 = vld [vmem:[%s1 + $0xc] sm:$0xf]
    %v42 = vld [vmem:[%s2] sm:$0x1]
    %v44 = vlaneseq
    %v45 = vshrl.u32 %v44, 7
    %v46 = vsub.s32 0, %v45
    %v47 = vrot.slane %v42, %v46
    %v51 = vunpack.c.l.b16 %v36
    %v52 = vunpack.c.l.b16 %v37
    %v53 = vpack.c.b16 %v52, %v51
    %v58 = vunpack.c.l.b16 %v38
    %v59 = vunpack.c.l.b16 %v39
    %v60 = vunpack.c.l.b16 %v40
    %v61 = vunpack.c.l.b16 %v41
    %v62 = vpack.c.b16 %v59, %v58
    %v63 = vpack.c.b16 %v61, %v60
    %vm66 = vcmask 261120
    %v68 = vsel %vm66, %v53, 0
    %70 = vmatprep.subr.bf16.mxu0 0
    %71 = vmatpush1.bf16.msra.mxu0 %v62
    %72 = vmatprep.subr.bf16.mxu0 0
    %73 = vmatpush1.bf16.msra.mxu0 %v63
    %74 = vmatprep.subr.bf16.mxu0 0
    %75 = vmatpush1.bf16.msra.mxu0 0
    %76 = vmatprep.subr.bf16.mxu0 0
    %77 = vmatpush1.bf16.msra.mxu0 0
    %78 = vmatprep.subr.bf16.mxu0 0
    %79 = vmatpush1.bf16.msra.mxu0 0
    %80 = vmatprep.subr.bf16.mxu0 0
    %81 = vmatpush1.bf16.msra.mxu0 0
    %82 = vmatprep.subr.bf16.mxu0 0
    %83 = vmatpush1.bf16.msra.mxu0 0
    %84 = vmatprep.subr.bf16.mxu0 0
    %85 = vmatpush1.bf16.msra.mxu0 0
    %86 = vmatprep.subr.bf16.mxu0 0
    %87 = vmatpush1.bf16.msra.mxu0 0
    %88 = vmatprep.subr.bf16.mxu0 0
    %89 = vmatpush1.bf16.msra.mxu0 0
    %90 = vmatprep.subr.bf16.mxu0 0
    %91 = vmatpush1.bf16.msra.mxu0 0
    %92 = vmatprep.subr.bf16.mxu0 0
    %93 = vmatpush1.bf16.msra.mxu0 0
    %94 = vmatprep.subr.bf16.mxu0 0
    %95 = vmatpush1.bf16.msra.mxu0 0
    %96 = vmatprep.subr.bf16.mxu0 0
    %97 = vmatpush1.bf16.msra.mxu0 0
    %98 = vmatprep.subr.bf16.mxu0 0
    %99 = vmatpush1.bf16.msra.mxu0 0
    %100 = vmatprep.subr.bf16.mxu0 0
    %101 = vmatpush1.bf16.msra.mxu0 0
    %102 = vmatprep.mubr.bf16.mxu0 0
    %103 = vmatmul.mubr.bf16.gmra.mrb[0].mxu0 %v68
    %v104 = vpop.f32.mrb[0].mxu0
    %v105 = vadd.f32 %v47, %v104
    %v106 = vpop.f32.mrb[0].mxu0
    %v107 = vpop.f32.mrb[0].mxu0
    %v108 = vadd.f32 %v47, %v107
    %v109 = vpop.f32.mrb[0].mxu0
    %110 = vdwg.mxu0
    %v111 = vmul.f32 %v105, 0.5
    %v112 = vmul.f32 %v108, 0.5
    %v113 = vmul.f32 %v105, 0.70710677
    %v114 = vmul.f32 %v108, 0.70710677
    %v115 = verf.f32.pop %v113
    %v116 = verf.f32.pop %v114
    %v117 = vadd.f32 %v115, 1.0
    %v118 = vadd.f32 %v116, 1.0
    %v119 = vmul.f32 %v111, %v117
    %v120 = vmul.f32 %v112, %v118
    %v121 = vld [vmem:[#allocation2] sm:$0xff]
    %v122 = vld [vmem:[#allocation2 + $0x8] sm:$0xff]
    %v123 = vpack.c.bf16 %v120, %v119
    %v124 = vld [vmem:[%s3] sm:$0xf]
    %v125 = vld [vmem:[%s3 + $0x4] sm:$0xf]
    %v126 = vld [vmem:[%s3 + $0x8] sm:$0xf]
    %v127 = vld [vmem:[%s3 + $0xc] sm:$0xf]
    %v128 = vld [vmem:[%s3 + $0x10] sm:$0xf]
    %v129 = vld [vmem:[%s3 + $0x14] sm:$0xf]
    %v130 = vld [vmem:[%s3 + $0x18] sm:$0xf]
    %v131 = vld [vmem:[%s3 + $0x1c] sm:$0xf]
    %v140 = vunpack.c.l.b16 %v124
    %v141 = vunpack.c.l.b16 %v125
    %v142 = vunpack.c.l.b16 %v126
    %v143 = vunpack.c.l.b16 %v127
    %v144 = vunpack.c.l.b16 %v128
    %v145 = vunpack.c.l.b16 %v129
    %v146 = vunpack.c.l.b16 %v130
    %v147 = vunpack.c.l.b16 %v131
    %v148 = vpack.c.b16 %v141, %v140
    %v149 = vpack.c.b16 %v143, %v142
    %v150 = vpack.c.b16 %v145, %v144
    %v151 = vpack.c.b16 %v147, %v146
    %vm156 = vcmask 523264
    %v158 = vsel %vm156, %v123, 0
    %160 = vmatprep.subr.bf16.mxu0 0
    %161 = vmatpush1.bf16.msra.mxu0 %v148
    %162 = vmatprep.subr.bf16.mxu0 0
    %163 = vmatpush1.bf16.msra.mxu0 %v149
    %164 = vmatprep.subr.bf16.mxu0 0
    %165 = vmatpush1.bf16.msra.mxu0 %v150
    %166 = vmatprep.subr.bf16.mxu0 0
    %167 = vmatpush1.bf16.msra.mxu0 %v151
    %168 = vmatprep.subr.bf16.mxu0 0
    %169 = vmatpush1.bf16.msra.mxu0 0
    %170 = vmatprep.subr.bf16.mxu0 0
    %171 = vmatpush1.bf16.msra.mxu0 0
    %172 = vmatprep.subr.bf16.mxu0 0
    %173 = vmatpush1.bf16.msra.mxu0 0
    %174 = vmatprep.subr.bf16.mxu0 0
    %175 = vmatpush1.bf16.msra.mxu0 0
    %176 = vmatprep.subr.bf16.mxu0 0
    %177 = vmatpush1.bf16.msra.mxu0 0
    %178 = vmatprep.subr.bf16.mxu0 0
    %179 = vmatpush1.bf16.msra.mxu0 0
    %180 = vmatprep.subr.bf16.mxu0 0
    %181 = vmatpush1.bf16.msra.mxu0 0
    %182 = vmatprep.subr.bf16.mxu0 0
    %183 = vmatpush1.bf16.msra.mxu0 0
    %184 = vmatprep.subr.bf16.mxu0 0
    %185 = vmatpush1.bf16.msra.mxu0 0
    %186 = vmatprep.subr.bf16.mxu0 0
    %187 = vmatpush1.bf16.msra.mxu0 0
    %188 = vmatprep.subr.bf16.mxu0 0
    %189 = vmatpush1.bf16.msra.mxu0 0
    %190 = vmatprep.subr.bf16.mxu0 0
    %191 = vmatpush1.bf16.msra.mxu0 0
    %192 = vmatprep.mubr.bf16.mxu0 0
    %193 = vmatmul.mubr.bf16.gmra.mrb[0].mxu0 %v158
    %v194 = vpop.f32.mrb[0].mxu0
    %v195 = vadd.f32 0.0, %v194
    %v196 = vpop.f32.mrb[0].mxu0
    %v197 = vpop.f32.mrb[0].mxu0
    %v198 = vadd.f32 0.0, %v197
    %v199 = vpop.f32.mrb[0].mxu0
    %200 = vdwg.mxu0
    %v201 = vadd.f32 %v121, %v195
    %v202 = vadd.f32 %v122, %v198
    %203 = vst.msk [vmem:[#allocation2] sm:$0xff] %vm66, %v201
    %204 = vst.msk [vmem:[#allocation2 + $0x8] sm:$0xff] %vm66, %v202
    // Predicated region
    $region26: #{ffn_forward.1} parent=1 // pred_check
      %p205 = pneg %p22
    $region27: #{ffn_forward.1} parent=1 // pred_check_branch
      %207 = sbr.rel (%p205) target = $region29
    $region28: #{ffn_forward.1} parent=1 // pred_region
      %v208 = vld [vmem:[#allocation2] sm:$0xff]
      %v209 = vld [vmem:[#allocation2 + $0x8] sm:$0xff]
      %210 = vst.msk [vmem:[#allocation3] sm:$0xff] %vm66, %v208
      %211 = vst.msk [vmem:[#allocation3 + $0x8] sm:$0xff] %vm66, %v209
    $region29: #{ffn_forward.1} parent=1 // pred_fallthru
      _
    // Predicated region
    $region30: #{ffn_forward.1} parent=1 // pred_check
      _
    $region31: #{ffn_forward.1} parent=1 // pred_check_branch
      %213 = sbr.rel (0) target = $region33
    $region32: #{ffn_forward.1} parent=1 // pred_region
      %s215 = ssub.s32 256, 256
      %216 = vsyncadd [#allocation4], %s215
      %s217 = sshll.u32 [#allocation3], 4
      %s218 = int_to_ptr.vmem [resolvable:$true] %s217
      %223 = dma.vmem_to_hbm [thread:$0]  %s218, 256, %s5, [#allocation4], 128, 128, 8
    $region33: #{ffn_forward.1} parent=1 // pred_fallthru
      _
    // Predicated region
    $region34: #{ffn_forward.1} parent=1 // pred_check
      _
    $region35: #{ffn_forward.1} parent=1 // pred_check_branch
      %225 = sbr.rel (0) target = $region37
    $region36: #{ffn_forward.1} parent=1 // pred_region
      %226 = dma.done [#allocation4], 256
    $region37: #{ffn_forward.1} parent=1 // pred_fallthru
      _
    %227 = vsyncpa [#allocation4], 1

</llo_original>
